<compile_context>
chip_gen: v7x
topology: tpu7x:2x2x1
jax: 0.10.0
libtpu: 0.0.40
codegen_flags: <defaults>
</compile_context>

<pallas_src>
import jax
import jax.numpy as jnp
from jax.experimental import pallas as pl
from jax.experimental.pallas import tpu as pltpu

_SUBLANE = 8
_LANE = 128


def _round_up(n, m):
    return ((n + m - 1) // m) * m


def _vmem_capacity_bytes():
    """Physical VMEM per TensorCore; conservative (v7x) fallback."""
    try:
        info = pltpu.get_tpu_info()
        for name in ("vmem_capacity_bytes", "vmem_size_bytes", "vmem_bytes"):
            cap = getattr(info, name, None)
            if cap:
                return int(cap)
    except Exception:
        pass
    return 64 * 1024 * 1024


def _make_sobel_kernel(H, W, Hp, Wp, needs_pad):
    """Kernel body for image planes of logical size (H, W).

    Block is (bn, 3, H, W).  When (H, W) is not (8, 128)-aligned an aligned
    (Hp, Wp) VMEM scratch is appended and the roll-based halo math runs on
    that workspace instead of on an unaligned value.
    """

    def kernel(x_ref, mag_ref, h_ref, v_ref, *scratch):
        pad_ref = scratch[0] if needs_pad else None
        bn = x_ref.shape[0]

        # Edge masks implementing conv2d's zero padding for the wrapped
        # rows/cols brought in by the rolls.  They also neutralize whatever
        # sits in the workspace's pad region, so it never needs zeroing.
        col = jax.lax.broadcasted_iota(jnp.int32, (Hp, Wp), 1)
        row = jax.lax.broadcasted_iota(jnp.int32, (Hp, Wp), 0)
        left = col == 0
        right = col == W - 1
        top = row == 0
        bot = row == H - 1

        def one_plane(x):
            # x: (H, W) f32 -> (mag, gh, gv) at (H, W) f32.
            if pad_ref is not None:
                pad_ref[0:H, 0:W] = x        # masked VMEM store, no HBM cost
                xw = pad_ref[...]            # aligned (Hp, Wp) workspace
            else:
                xw = x

            # +/-1 column shifts via XLU roll, true image edges zeroed.
            x_l = jnp.where(left, 0.0, pltpu.roll(xw, 1, 1))         # x[i, j-1]
            x_r = jnp.where(right, 0.0, pltpu.roll(xw, Wp - 1, 1))   # x[i, j+1]

            # Separable Sobel.
            s = x_l + 2.0 * xw + x_r                                 # row smooth
            d = x_l - x_r                                            # row diff

            s_u = jnp.where(top, 0.0, pltpu.roll(s, 1, 0))           # s[i-1, :]
            s_d = jnp.where(bot, 0.0, pltpu.roll(s, Hp - 1, 0))      # s[i+1, :]
            d_u = jnp.where(top, 0.0, pltpu.roll(d, 1, 0))
            d_d = jnp.where(bot, 0.0, pltpu.roll(d, Hp - 1, 0))

            gv = s_u - s_d             # kernel_v = [[1,2,1],[0,0,0],[-1,-2,-1]]
            gh = d_u + 2.0 * d + d_d   # kernel_h = [[1,0,-1],[2,0,-2],[1,0,-1]]
            mag = jnp.sqrt(gv * gv + gh * gh + 1e-6)

            if pad_ref is not None:    # origin slices: no cross-lane movement
                mag, gh, gv = mag[0:H, 0:W], gh[0:H, 0:W], gv[0:H, 0:W]
            return mag, gh, gv

        def one_image(i):
            x3 = x_ref[i].astype(jnp.float32)        # (3, H, W)
            for c in range(3):                       # bounded static unroll
                mag, gh, gv = one_plane(x3[c])
                mag_ref[i, c] = mag.astype(mag_ref.dtype)
                h_ref[i, c] = gh.astype(h_ref.dtype)
                v_ref[i, c] = gv.astype(v_ref.dtype)

        if bn == 1:
            one_image(0)
        else:
            # fori_loop (not a Python unroll) bounds live temporaries / vreg
            # pressure to a single image at a time.
            def body(i, carry):
                one_image(i)
                return carry

            jax.lax.fori_loop(0, bn, body, 0)

    return kernel


def get_gradient(x, out_dtype=None):
    """Pallas equivalent of Get_gradient.forward.

    x: (N, C>=3, H, W); channels 0..2 are used (matching the PyTorch module).
    Returns (grad_magnitude, grad_h, grad_v), each (N, 3, H, W).
    out_dtype: optional narrower output dtype (e.g. jnp.bfloat16); math stays
      f32 and only the final stores narrow (cuts ~3/4 of HBM write bytes).
    """
    N, C, H, W = x.shape
    assert C >= 3, "Get_gradient uses channels 0,1,2"
    out_dtype = jnp.dtype(x.dtype if out_dtype is None else out_dtype)

    Hp = _round_up(H, _SUBLANE)
    Wp = _round_up(W, _LANE)
    needs_pad = (Hp != H) or (Wp != W)

    # ---- chip-adaptive resource sizing ----------------------------------
    in_item = jnp.dtype(x.dtype).itemsize
    img_in = 3 * H * W * in_item                  # one image's input bytes
    img_out = 3 * 3 * H * W * out_dtype.itemsize  # its three output planes
    per_img_buf = 2 * img_in + 2 * img_out        # double-buffered in + outs
    temps = 14 * Hp * Wp * 4 + (Hp * Wp * 4 if needs_pad else 0)
    headroom = 4 * 1024 * 1024

    cap = _vmem_capacity_bytes()                  # 64 MiB (v7x) .. 128 MiB
    vmem_limit = min((3 * cap) // 4, 100 * 1024 * 1024)
    buf_budget = max(per_img_buf, vmem_limit - temps - headroom)

    # Images per grid step: amortize the ~0.35us/step overhead, stay inside
    # the VMEM budget, and prefer an even step count so v7x's two TensorCores
    # split the 'parallel' axis evenly.
    bn_max = int(max(1, min(N, 8, buf_budget // per_img_buf)))
    divisors = [b for b in range(1, bn_max + 1) if N % b == 0]
    even = [b for b in divisors if (N // b) % 2 == 0]
    bn = max(even) if even else max(divisors)

    # Give the compiler what this tiling needs, but never the whole physical
    # VMEM (leave scratch / pipelining headroom, especially on v7x).
    need = bn * per_img_buf + temps + headroom
    vmem_limit = int(min(max(vmem_limit, need), (15 * cap) // 16))

    spec = pl.BlockSpec((bn, 3, H, W), lambda n: (n, 0, 0, 0))
    out_sds = jax.ShapeDtypeStruct((N, 3, H, W), out_dtype)
    scratch_shapes = [pltpu.VMEM((Hp, Wp), jnp.float32)] if needs_pad else []

    kernel = _make_sobel_kernel(H, W, Hp, Wp, needs_pad)
    # Note: if xprof ever shows exposed output-writeback DMA, try
    # pipeline_mode=pl.Buffered(3) on the three out_specs (kept default here).
    mag, gh, gv = pl.pallas_call(
        kernel,
        out_shape=(out_sds, out_sds, out_sds),
        grid_spec=pltpu.PrefetchScalarGridSpec(
            num_scalar_prefetch=0,
            grid=(N // bn,),
            in_specs=[spec],
            out_specs=[spec, spec, spec],
            scratch_shapes=scratch_shapes,
        ),
        compiler_params=pltpu.CompilerParams(
            dimension_semantics=("parallel",),
            vmem_limit_bytes=vmem_limit,
        ),
    )(x)
    return mag, gh, gv


def _reference(x):
    """Pure-JAX reference (direct stencil, matches F.conv2d padding=1)."""
    x3 = x[:, :3].astype(jnp.float32)
    xp = jnp.pad(x3, ((0, 0), (0, 0), (1, 1), (1, 1)))
    H, W = x.shape[2], x.shape[3]

    def win(dy, dx):
        return xp[:, :, dy:dy + H, dx:dx + W]

    gv = (win(0, 0) + 2 * win(0, 1) + win(0, 2)
          - win(2, 0) - 2 * win(2, 1) - win(2, 2))
    gh = (win(0, 0) + 2 * win(1, 0) + win(2, 0)
          - win(0, 2) - 2 * win(1, 2) - win(2, 2))
    mag = jnp.sqrt(gv * gv + gh * gh + 1e-6)
    return mag, gh, gv


if __name__ == "__main__":
    # Primary check: unaligned W (exercises the in-kernel aligned workspace).
    key = jax.random.PRNGKey(0)
    N, C, H, W = 2, 4, 16, 16
    x = jax.random.normal(key, (N, C, H, W), dtype=jnp.float32)

    mag, gh, gv = get_gradient(x)
    jax.block_until_ready((mag, gh, gv))

    r_mag, r_gh, r_gv = _reference(x)
    assert mag.shape == (N, 3, H, W)
    assert jnp.allclose(mag, r_mag, atol=1e-5, rtol=1e-5)
    assert jnp.allclose(gh, r_gh, atol=1e-5, rtol=1e-5)
    assert jnp.allclose(gv, r_gv, atol=1e-5, rtol=1e-5)

    # Secondary check: (8, 128)-aligned plane (direct, workspace-free path).
    x2 = jax.random.normal(jax.random.PRNGKey(1), (1, 3, 16, 128),
                           dtype=jnp.float32)
    mag2, gh2, gv2 = get_gradient(x2)
    jax.block_until_ready((mag2, gh2, gv2))
    r2 = _reference(x2)
    assert jnp.allclose(mag2, r2[0], atol=1e-5, rtol=1e-5)
    assert jnp.allclose(gh2, r2[1], atol=1e-5, rtol=1e-5)
    assert jnp.allclose(gv2, r2[2], atol=1e-5, rtol=1e-5)

    print("KERNEL_OK")
</pallas_src>

<mosaic_0001>
module attributes {stable_mosaic.version = 11 : i64} {
  func.func @kernel(%arg0: i32, %arg1: memref<1x3x16x16xf32, #tpu.memory_space<vmem>>, %arg2: memref<1x3x16x16xf32, #tpu.memory_space<vmem>>, %arg3: memref<1x3x16x16xf32, #tpu.memory_space<vmem>>, %arg4: memref<1x3x16x16xf32, #tpu.memory_space<vmem>>, %arg5: memref<16x128xf32, #tpu.memory_space<vmem>>) attributes {dimension_semantics = [#tpu.dimension_semantics<parallel>], iteration_bounds = array<i64: 2>, scalar_prefetch = 0 : i64, scratch_operands = 1 : i64, tpu.core_type = #tpu.core_type<tc>, window_params = [{transform_indices = @transform_0, window_bounds = array<i64: 1, 3, 16, 16>}, {transform_indices = @transform_1, window_bounds = array<i64: 1, 3, 16, 16>}, {transform_indices = @transform_2, window_bounds = array<i64: 1, 3, 16, 16>}, {transform_indices = @transform_3, window_bounds = array<i64: 1, 3, 16, 16>}]} {
    %0 = tpu.iota {dimensions = array<i32: 1>} : vector<16x128xi32>
    %1 = tpu.iota {dimensions = array<i32: 0>} : vector<16x128xi32>
    %c0_i32 = arith.constant 0 : i32
    %2 = vector.broadcast %c0_i32 : i32 to vector<16x128xi32>
    %3 = arith.cmpi eq, %0, %2 : vector<16x128xi32>
    %c15_i32 = arith.constant 15 : i32
    %4 = vector.broadcast %c15_i32 : i32 to vector<16x128xi32>
    %5 = arith.cmpi eq, %0, %4 : vector<16x128xi32>
    %c0_i32_0 = arith.constant 0 : i32
    %6 = vector.broadcast %c0_i32_0 : i32 to vector<16x128xi32>
    %7 = arith.cmpi eq, %1, %6 : vector<16x128xi32>
    %c15_i32_1 = arith.constant 15 : i32
    %8 = vector.broadcast %c15_i32_1 : i32 to vector<16x128xi32>
    %9 = arith.cmpi eq, %1, %8 : vector<16x128xi32>
    %c0 = arith.constant 0 : index
    %c0_2 = arith.constant 0 : index
    %c0_3 = arith.constant 0 : index
    %c0_4 = arith.constant 0 : index
    %10 = vector.load %arg1[%c0, %c0_2, %c0_3, %c0_4] : memref<1x3x16x16xf32, #tpu.memory_space<vmem>>, vector<1x3x16x16xf32>
    %11 = vector.shape_cast %10 : vector<1x3x16x16xf32> to vector<3x16x16xf32>
    %12 = vector.extract_strided_slice %11 {offsets = [0, 0, 0], sizes = [1, 16, 16], strides = [1, 1, 1]} : vector<3x16x16xf32> to vector<1x16x16xf32>
    %13 = vector.shape_cast %12 : vector<1x16x16xf32> to vector<16x16xf32>
    %c0_5 = arith.constant 0 : index
    %c0_6 = arith.constant 0 : index
    %14 = vector.load %arg5[%c0_5, %c0_6] : memref<16x128xf32, #tpu.memory_space<vmem>>, vector<16x16xf32>
    tpu.vector_store %arg5[%c0_5, %c0_6], %13 {strides = array<i32>} : memref<16x128xf32, #tpu.memory_space<vmem>>, vector<16x16xf32>,
    %c0_7 = arith.constant 0 : index
    %c0_8 = arith.constant 0 : index
    %15 = vector.load %arg5[%c0_7, %c0_8] : memref<16x128xf32, #tpu.memory_space<vmem>>, vector<16x128xf32>
    %c1_i32 = arith.constant 1 : i32
    %16 = tpu.dynamic_rotate %15 by %c1_i32 dim 1 : vector<16x128xf32>, i32 -> vector<16x128xf32>
    %cst = arith.constant 0.000000e+00 : f32
    %17 = vector.broadcast %cst : f32 to vector<16x128xf32>
    %18 = arith.select %3, %17, %16 : vector<16x128xi1>, vector<16x128xf32>
    %c127_i32 = arith.constant 127 : i32
    %19 = tpu.dynamic_rotate %15 by %c127_i32 dim 1 : vector<16x128xf32>, i32 -> vector<16x128xf32>
    %cst_9 = arith.constant 0.000000e+00 : f32
    %20 = vector.broadcast %cst_9 : f32 to vector<16x128xf32>
    %21 = arith.select %5, %20, %19 : vector<16x128xi1>, vector<16x128xf32>
    %cst_10 = arith.constant 2.000000e+00 : f32
    %22 = vector.broadcast %cst_10 : f32 to vector<16x128xf32>
    %23 = arith.mulf %22, %15 : vector<16x128xf32>
    %24 = arith.addf %18, %23 : vector<16x128xf32>
    %25 = arith.addf %24, %21 : vector<16x128xf32>
    %26 = arith.subf %18, %21 : vector<16x128xf32>
    %c1_i32_11 = arith.constant 1 : i32
    %27 = tpu.dynamic_rotate %25 by %c1_i32_11 dim 0 : vector<16x128xf32>, i32 -> vector<16x128xf32>
    %cst_12 = arith.constant 0.000000e+00 : f32
    %28 = vector.broadcast %cst_12 : f32 to vector<16x128xf32>
    %29 = arith.select %7, %28, %27 : vector<16x128xi1>, vector<16x128xf32>
    %c15_i32_13 = arith.constant 15 : i32
    %30 = tpu.dynamic_rotate %25 by %c15_i32_13 dim 0 : vector<16x128xf32>, i32 -> vector<16x128xf32>
    %cst_14 = arith.constant 0.000000e+00 : f32
    %31 = vector.broadcast %cst_14 : f32 to vector<16x128xf32>
    %32 = arith.select %9, %31, %30 : vector<16x128xi1>, vector<16x128xf32>
    %c1_i32_15 = arith.constant 1 : i32
    %33 = tpu.dynamic_rotate %26 by %c1_i32_15 dim 0 : vector<16x128xf32>, i32 -> vector<16x128xf32>
    %cst_16 = arith.constant 0.000000e+00 : f32
    %34 = vector.broadcast %cst_16 : f32 to vector<16x128xf32>
    %35 = arith.select %7, %34, %33 : vector<16x128xi1>, vector<16x128xf32>
    %c15_i32_17 = arith.constant 15 : i32
    %36 = tpu.dynamic_rotate %26 by %c15_i32_17 dim 0 : vector<16x128xf32>, i32 -> vector<16x128xf32>
    %cst_18 = arith.constant 0.000000e+00 : f32
    %37 = vector.broadcast %cst_18 : f32 to vector<16x128xf32>
    %38 = arith.select %9, %37, %36 : vector<16x128xi1>, vector<16x128xf32>
    %39 = arith.subf %29, %32 : vector<16x128xf32>
    %cst_19 = arith.constant 2.000000e+00 : f32
    %40 = vector.broadcast %cst_19 : f32 to vector<16x128xf32>
    %41 = arith.mulf %40, %26 : vector<16x128xf32>
    %42 = arith.addf %35, %41 : vector<16x128xf32>
    %43 = arith.addf %42, %38 : vector<16x128xf32>
    %44 = arith.mulf %39, %39 : vector<16x128xf32>
    %45 = arith.mulf %43, %43 : vector<16x128xf32>
    %46 = arith.addf %44, %45 : vector<16x128xf32>
    %cst_20 = arith.constant 9.99999997E-7 : f32
    %47 = vector.broadcast %cst_20 : f32 to vector<16x128xf32>
    %48 = arith.addf %46, %47 : vector<16x128xf32>
    %49 = math.sqrt %48 : vector<16x128xf32>
    %50 = vector.extract_strided_slice %49 {offsets = [0, 0], sizes = [16, 16], strides = [1, 1]} : vector<16x128xf32> to vector<16x16xf32>
    %51 = vector.extract_strided_slice %43 {offsets = [0, 0], sizes = [16, 16], strides = [1, 1]} : vector<16x128xf32> to vector<16x16xf32>
    %52 = vector.extract_strided_slice %39 {offsets = [0, 0], sizes = [16, 16], strides = [1, 1]} : vector<16x128xf32> to vector<16x16xf32>
    %c0_21 = arith.constant 0 : index
    %c0_22 = arith.constant 0 : index
    %c0_23 = arith.constant 0 : index
    %c0_24 = arith.constant 0 : index
    %53 = vector.load %arg2[%c0_21, %c0_22, %c0_23, %c0_24] : memref<1x3x16x16xf32, #tpu.memory_space<vmem>>, vector<1x1x16x16xf32>
    %54 = vector.shape_cast %53 : vector<1x1x16x16xf32> to vector<16x16xf32>
    %55 = vector.shape_cast %50 : vector<16x16xf32> to vector<1x1x16x16xf32>
    tpu.vector_store %arg2[%c0_21, %c0_22, %c0_23, %c0_24], %55 {strides = array<i32>} : memref<1x3x16x16xf32, #tpu.memory_space<vmem>>, vector<1x1x16x16xf32>,
    %c0_25 = arith.constant 0 : index
    %c0_26 = arith.constant 0 : index
    %c0_27 = arith.constant 0 : index
    %c0_28 = arith.constant 0 : index
    %56 = vector.load %arg3[%c0_25, %c0_26, %c0_27, %c0_28] : memref<1x3x16x16xf32, #tpu.memory_space<vmem>>, vector<1x1x16x16xf32>
    %57 = vector.shape_cast %56 : vector<1x1x16x16xf32> to vector<16x16xf32>
    %58 = vector.shape_cast %51 : vector<16x16xf32> to vector<1x1x16x16xf32>
    tpu.vector_store %arg3[%c0_25, %c0_26, %c0_27, %c0_28], %58 {strides = array<i32>} : memref<1x3x16x16xf32, #tpu.memory_space<vmem>>, vector<1x1x16x16xf32>,
    %c0_29 = arith.constant 0 : index
    %c0_30 = arith.constant 0 : index
    %c0_31 = arith.constant 0 : index
    %c0_32 = arith.constant 0 : index
    %59 = vector.load %arg4[%c0_29, %c0_30, %c0_31, %c0_32] : memref<1x3x16x16xf32, #tpu.memory_space<vmem>>, vector<1x1x16x16xf32>
    %60 = vector.shape_cast %59 : vector<1x1x16x16xf32> to vector<16x16xf32>
    %61 = vector.shape_cast %52 : vector<16x16xf32> to vector<1x1x16x16xf32>
    tpu.vector_store %arg4[%c0_29, %c0_30, %c0_31, %c0_32], %61 {strides = array<i32>} : memref<1x3x16x16xf32, #tpu.memory_space<vmem>>, vector<1x1x16x16xf32>,
    %62 = vector.extract_strided_slice %11 {offsets = [1, 0, 0], sizes = [1, 16, 16], strides = [1, 1, 1]} : vector<3x16x16xf32> to vector<1x16x16xf32>
    %63 = vector.shape_cast %62 : vector<1x16x16xf32> to vector<16x16xf32>
    %c0_33 = arith.constant 0 : index
    %c0_34 = arith.constant 0 : index
    %64 = vector.load %arg5[%c0_33, %c0_34] : memref<16x128xf32, #tpu.memory_space<vmem>>, vector<16x16xf32>
    tpu.vector_store %arg5[%c0_33, %c0_34], %63 {strides = array<i32>} : memref<16x128xf32, #tpu.memory_space<vmem>>, vector<16x16xf32>,
    %c0_35 = arith.constant 0 : index
    %c0_36 = arith.constant 0 : index
    %65 = vector.load %arg5[%c0_35, %c0_36] : memref<16x128xf32, #tpu.memory_space<vmem>>, vector<16x128xf32>
    %c1_i32_37 = arith.constant 1 : i32
    %66 = tpu.dynamic_rotate %65 by %c1_i32_37 dim 1 : vector<16x128xf32>, i32 -> vector<16x128xf32>
    %cst_38 = arith.constant 0.000000e+00 : f32
    %67 = vector.broadcast %cst_38 : f32 to vector<16x128xf32>
    %68 = arith.select %3, %67, %66 : vector<16x128xi1>, vector<16x128xf32>
    %c127_i32_39 = arith.constant 127 : i32
    %69 = tpu.dynamic_rotate %65 by %c127_i32_39 dim 1 : vector<16x128xf32>, i32 -> vector<16x128xf32>
    %cst_40 = arith.constant 0.000000e+00 : f32
    %70 = vector.broadcast %cst_40 : f32 to vector<16x128xf32>
    %71 = arith.select %5, %70, %69 : vector<16x128xi1>, vector<16x128xf32>
    %cst_41 = arith.constant 2.000000e+00 : f32
    %72 = vector.broadcast %cst_41 : f32 to vector<16x128xf32>
    %73 = arith.mulf %72, %65 : vector<16x128xf32>
    %74 = arith.addf %68, %73 : vector<16x128xf32>
    %75 = arith.addf %74, %71 : vector<16x128xf32>
    %76 = arith.subf %68, %71 : vector<16x128xf32>
    %c1_i32_42 = arith.constant 1 : i32
    %77 = tpu.dynamic_rotate %75 by %c1_i32_42 dim 0 : vector<16x128xf32>, i32 -> vector<16x128xf32>
    %cst_43 = arith.constant 0.000000e+00 : f32
    %78 = vector.broadcast %cst_43 : f32 to vector<16x128xf32>
    %79 = arith.select %7, %78, %77 : vector<16x128xi1>, vector<16x128xf32>
    %c15_i32_44 = arith.constant 15 : i32
    %80 = tpu.dynamic_rotate %75 by %c15_i32_44 dim 0 : vector<16x128xf32>, i32 -> vector<16x128xf32>
    %cst_45 = arith.constant 0.000000e+00 : f32
    %81 = vector.broadcast %cst_45 : f32 to vector<16x128xf32>
    %82 = arith.select %9, %81, %80 : vector<16x128xi1>, vector<16x128xf32>
    %c1_i32_46 = arith.constant 1 : i32
    %83 = tpu.dynamic_rotate %76 by %c1_i32_46 dim 0 : vector<16x128xf32>, i32 -> vector<16x128xf32>
    %cst_47 = arith.constant 0.000000e+00 : f32
    %84 = vector.broadcast %cst_47 : f32 to vector<16x128xf32>
    %85 = arith.select %7, %84, %83 : vector<16x128xi1>, vector<16x128xf32>
    %c15_i32_48 = arith.constant 15 : i32
    %86 = tpu.dynamic_rotate %76 by %c15_i32_48 dim 0 : vector<16x128xf32>, i32 -> vector<16x128xf32>
    %cst_49 = arith.constant 0.000000e+00 : f32
    %87 = vector.broadcast %cst_49 : f32 to vector<16x128xf32>
    %88 = arith.select %9, %87, %86 : vector<16x128xi1>, vector<16x128xf32>
    %89 = arith.subf %79, %82 : vector<16x128xf32>
    %cst_50 = arith.constant 2.000000e+00 : f32
    %90 = vector.broadcast %cst_50 : f32 to vector<16x128xf32>
    %91 = arith.mulf %90, %76 : vector<16x128xf32>
    %92 = arith.addf %85, %91 : vector<16x128xf32>
    %93 = arith.addf %92, %88 : vector<16x128xf32>
    %94 = arith.mulf %89, %89 : vector<16x128xf32>
    %95 = arith.mulf %93, %93 : vector<16x128xf32>
    %96 = arith.addf %94, %95 : vector<16x128xf32>
    %cst_51 = arith.constant 9.99999997E-7 : f32
    %97 = vector.broadcast %cst_51 : f32 to vector<16x128xf32>
    %98 = arith.addf %96, %97 : vector<16x128xf32>
    %99 = math.sqrt %98 : vector<16x128xf32>
    %100 = vector.extract_strided_slice %99 {offsets = [0, 0], sizes = [16, 16], strides = [1, 1]} : vector<16x128xf32> to vector<16x16xf32>
    %101 = vector.extract_strided_slice %93 {offsets = [0, 0], sizes = [16, 16], strides = [1, 1]} : vector<16x128xf32> to vector<16x16xf32>
    %102 = vector.extract_strided_slice %89 {offsets = [0, 0], sizes = [16, 16], strides = [1, 1]} : vector<16x128xf32> to vector<16x16xf32>
    %c0_52 = arith.constant 0 : index
    %c1 = arith.constant 1 : index
    %c0_53 = arith.constant 0 : index
    %c0_54 = arith.constant 0 : index
    %103 = vector.load %arg2[%c0_52, %c1, %c0_53, %c0_54] : memref<1x3x16x16xf32, #tpu.memory_space<vmem>>, vector<1x1x16x16xf32>
    %104 = vector.shape_cast %103 : vector<1x1x16x16xf32> to vector<16x16xf32>
    %105 = vector.shape_cast %100 : vector<16x16xf32> to vector<1x1x16x16xf32>
    tpu.vector_store %arg2[%c0_52, %c1, %c0_53, %c0_54], %105 {strides = array<i32>} : memref<1x3x16x16xf32, #tpu.memory_space<vmem>>, vector<1x1x16x16xf32>,
    %c0_55 = arith.constant 0 : index
    %c1_56 = arith.constant 1 : index
    %c0_57 = arith.constant 0 : index
    %c0_58 = arith.constant 0 : index
    %106 = vector.load %arg3[%c0_55, %c1_56, %c0_57, %c0_58] : memref<1x3x16x16xf32, #tpu.memory_space<vmem>>, vector<1x1x16x16xf32>
    %107 = vector.shape_cast %106 : vector<1x1x16x16xf32> to vector<16x16xf32>
    %108 = vector.shape_cast %101 : vector<16x16xf32> to vector<1x1x16x16xf32>
    tpu.vector_store %arg3[%c0_55, %c1_56, %c0_57, %c0_58], %108 {strides = array<i32>} : memref<1x3x16x16xf32, #tpu.memory_space<vmem>>, vector<1x1x16x16xf32>,
    %c0_59 = arith.constant 0 : index
    %c1_60 = arith.constant 1 : index
    %c0_61 = arith.constant 0 : index
    %c0_62 = arith.constant 0 : index
    %109 = vector.load %arg4[%c0_59, %c1_60, %c0_61, %c0_62] : memref<1x3x16x16xf32, #tpu.memory_space<vmem>>, vector<1x1x16x16xf32>
    %110 = vector.shape_cast %109 : vector<1x1x16x16xf32> to vector<16x16xf32>
    %111 = vector.shape_cast %102 : vector<16x16xf32> to vector<1x1x16x16xf32>
    tpu.vector_store %arg4[%c0_59, %c1_60, %c0_61, %c0_62], %111 {strides = array<i32>} : memref<1x3x16x16xf32, #tpu.memory_space<vmem>>, vector<1x1x16x16xf32>,
    %112 = vector.extract_strided_slice %11 {offsets = [2, 0, 0], sizes = [1, 16, 16], strides = [1, 1, 1]} : vector<3x16x16xf32> to vector<1x16x16xf32>
    %113 = vector.shape_cast %112 : vector<1x16x16xf32> to vector<16x16xf32>
    %c0_63 = arith.constant 0 : index
    %c0_64 = arith.constant 0 : index
    %114 = vector.load %arg5[%c0_63, %c0_64] : memref<16x128xf32, #tpu.memory_space<vmem>>, vector<16x16xf32>
    tpu.vector_store %arg5[%c0_63, %c0_64], %113 {strides = array<i32>} : memref<16x128xf32, #tpu.memory_space<vmem>>, vector<16x16xf32>,
    %c0_65 = arith.constant 0 : index
    %c0_66 = arith.constant 0 : index
    %115 = vector.load %arg5[%c0_65, %c0_66] : memref<16x128xf32, #tpu.memory_space<vmem>>, vector<16x128xf32>
    %c1_i32_67 = arith.constant 1 : i32
    %116 = tpu.dynamic_rotate %115 by %c1_i32_67 dim 1 : vector<16x128xf32>, i32 -> vector<16x128xf32>
    %cst_68 = arith.constant 0.000000e+00 : f32
    %117 = vector.broadcast %cst_68 : f32 to vector<16x128xf32>
    %118 = arith.select %3, %117, %116 : vector<16x128xi1>, vector<16x128xf32>
    %c127_i32_69 = arith.constant 127 : i32
    %119 = tpu.dynamic_rotate %115 by %c127_i32_69 dim 1 : vector<16x128xf32>, i32 -> vector<16x128xf32>
    %cst_70 = arith.constant 0.000000e+00 : f32
    %120 = vector.broadcast %cst_70 : f32 to vector<16x128xf32>
    %121 = arith.select %5, %120, %119 : vector<16x128xi1>, vector<16x128xf32>
    %cst_71 = arith.constant 2.000000e+00 : f32
    %122 = vector.broadcast %cst_71 : f32 to vector<16x128xf32>
    %123 = arith.mulf %122, %115 : vector<16x128xf32>
    %124 = arith.addf %118, %123 : vector<16x128xf32>
    %125 = arith.addf %124, %121 : vector<16x128xf32>
    %126 = arith.subf %118, %121 : vector<16x128xf32>
    %c1_i32_72 = arith.constant 1 : i32
    %127 = tpu.dynamic_rotate %125 by %c1_i32_72 dim 0 : vector<16x128xf32>, i32 -> vector<16x128xf32>
    %cst_73 = arith.constant 0.000000e+00 : f32
    %128 = vector.broadcast %cst_73 : f32 to vector<16x128xf32>
    %129 = arith.select %7, %128, %127 : vector<16x128xi1>, vector<16x128xf32>
    %c15_i32_74 = arith.constant 15 : i32
    %130 = tpu.dynamic_rotate %125 by %c15_i32_74 dim 0 : vector<16x128xf32>, i32 -> vector<16x128xf32>
    %cst_75 = arith.constant 0.000000e+00 : f32
    %131 = vector.broadcast %cst_75 : f32 to vector<16x128xf32>
    %132 = arith.select %9, %131, %130 : vector<16x128xi1>, vector<16x128xf32>
    %c1_i32_76 = arith.constant 1 : i32
    %133 = tpu.dynamic_rotate %126 by %c1_i32_76 dim 0 : vector<16x128xf32>, i32 -> vector<16x128xf32>
    %cst_77 = arith.constant 0.000000e+00 : f32
    %134 = vector.broadcast %cst_77 : f32 to vector<16x128xf32>
    %135 = arith.select %7, %134, %133 : vector<16x128xi1>, vector<16x128xf32>
    %c15_i32_78 = arith.constant 15 : i32
    %136 = tpu.dynamic_rotate %126 by %c15_i32_78 dim 0 : vector<16x128xf32>, i32 -> vector<16x128xf32>
    %cst_79 = arith.constant 0.000000e+00 : f32
    %137 = vector.broadcast %cst_79 : f32 to vector<16x128xf32>
    %138 = arith.select %9, %137, %136 : vector<16x128xi1>, vector<16x128xf32>
    %139 = arith.subf %129, %132 : vector<16x128xf32>
    %cst_80 = arith.constant 2.000000e+00 : f32
    %140 = vector.broadcast %cst_80 : f32 to vector<16x128xf32>
    %141 = arith.mulf %140, %126 : vector<16x128xf32>
    %142 = arith.addf %135, %141 : vector<16x128xf32>
    %143 = arith.addf %142, %138 : vector<16x128xf32>
    %144 = arith.mulf %139, %139 : vector<16x128xf32>
    %145 = arith.mulf %143, %143 : vector<16x128xf32>
    %146 = arith.addf %144, %145 : vector<16x128xf32>
    %cst_81 = arith.constant 9.99999997E-7 : f32
    %147 = vector.broadcast %cst_81 : f32 to vector<16x128xf32>
    %148 = arith.addf %146, %147 : vector<16x128xf32>
    %149 = math.sqrt %148 : vector<16x128xf32>
    %150 = vector.extract_strided_slice %149 {offsets = [0, 0], sizes = [16, 16], strides = [1, 1]} : vector<16x128xf32> to vector<16x16xf32>
    %151 = vector.extract_strided_slice %143 {offsets = [0, 0], sizes = [16, 16], strides = [1, 1]} : vector<16x128xf32> to vector<16x16xf32>
    %152 = vector.extract_strided_slice %139 {offsets = [0, 0], sizes = [16, 16], strides = [1, 1]} : vector<16x128xf32> to vector<16x16xf32>
    %c0_82 = arith.constant 0 : index
    %c2 = arith.constant 2 : index
    %c0_83 = arith.constant 0 : index
    %c0_84 = arith.constant 0 : index
    %153 = vector.load %arg2[%c0_82, %c2, %c0_83, %c0_84] : memref<1x3x16x16xf32, #tpu.memory_space<vmem>>, vector<1x1x16x16xf32>
    %154 = vector.shape_cast %153 : vector<1x1x16x16xf32> to vector<16x16xf32>
    %155 = vector.shape_cast %150 : vector<16x16xf32> to vector<1x1x16x16xf32>
    tpu.vector_store %arg2[%c0_82, %c2, %c0_83, %c0_84], %155 {strides = array<i32>} : memref<1x3x16x16xf32, #tpu.memory_space<vmem>>, vector<1x1x16x16xf32>,
    %c0_85 = arith.constant 0 : index
    %c2_86 = arith.constant 2 : index
    %c0_87 = arith.constant 0 : index
    %c0_88 = arith.constant 0 : index
    %156 = vector.load %arg3[%c0_85, %c2_86, %c0_87, %c0_88] : memref<1x3x16x16xf32, #tpu.memory_space<vmem>>, vector<1x1x16x16xf32>
    %157 = vector.shape_cast %156 : vector<1x1x16x16xf32> to vector<16x16xf32>
    %158 = vector.shape_cast %151 : vector<16x16xf32> to vector<1x1x16x16xf32>
    tpu.vector_store %arg3[%c0_85, %c2_86, %c0_87, %c0_88], %158 {strides = array<i32>} : memref<1x3x16x16xf32, #tpu.memory_space<vmem>>, vector<1x1x16x16xf32>,
    %c0_89 = arith.constant 0 : index
    %c2_90 = arith.constant 2 : index
    %c0_91 = arith.constant 0 : index
    %c0_92 = arith.constant 0 : index
    %159 = vector.load %arg4[%c0_89, %c2_90, %c0_91, %c0_92] : memref<1x3x16x16xf32, #tpu.memory_space<vmem>>, vector<1x1x16x16xf32>
    %160 = vector.shape_cast %159 : vector<1x1x16x16xf32> to vector<16x16xf32>
    %161 = vector.shape_cast %152 : vector<16x16xf32> to vector<1x1x16x16xf32>
    tpu.vector_store %arg4[%c0_89, %c2_90, %c0_91, %c0_92], %161 {strides = array<i32>} : memref<1x3x16x16xf32, #tpu.memory_space<vmem>>, vector<1x1x16x16xf32>,
    return
  }
  func.func @transform_0(%arg0: i32) -> (i32, i32, i32, i32) {
    %c0_i32 = arith.constant 0 : i32
    %c0_i32_0 = arith.constant 0 : i32
    %c0_i32_1 = arith.constant 0 : i32
    %c0_i32_2 = arith.constant 0 : i32
    return %arg0, %c0_i32, %c0_i32_0, %c0_i32_1 : i32, i32, i32, i32
  }
  func.func @transform_1(%arg0: i32) -> (i32, i32, i32, i32) {
    %c0_i32 = arith.constant 0 : i32
    %c0_i32_0 = arith.constant 0 : i32
    %c0_i32_1 = arith.constant 0 : i32
    %c0_i32_2 = arith.constant 0 : i32
    return %arg0, %c0_i32, %c0_i32_0, %c0_i32_1 : i32, i32, i32, i32
  }
  func.func @transform_2(%arg0: i32) -> (i32, i32, i32, i32) {
    %c0_i32 = arith.constant 0 : i32
    %c0_i32_0 = arith.constant 0 : i32
    %c0_i32_1 = arith.constant 0 : i32
    %c0_i32_2 = arith.constant 0 : i32
    return %arg0, %c0_i32, %c0_i32_0, %c0_i32_1 : i32, i32, i32, i32
  }
  func.func @transform_3(%arg0: i32) -> (i32, i32, i32, i32) {
    %c0_i32 = arith.constant 0 : i32
    %c0_i32_0 = arith.constant 0 : i32
    %c0_i32_1 = arith.constant 0 : i32
    %c0_i32_2 = arith.constant 0 : i32
    return %arg0, %c0_i32, %c0_i32_0, %c0_i32_1 : i32, i32, i32, i32
  }
}

</mosaic_0001>

<llo_original>
// kernel: tpu_custom_call.1
$region0: #{tpu_custom_call.1}
  #allocation0 [shape = 'u32[]', space=smem, size = 0x4, offset = 0x4, fixed_abs, tag = 'smem constant byte address 0x4 - core index']
  #allocation1 [shape = 'u32[144,128]{1,0:T(1,128)}', space=vmem, size = 0x12000, scoped, tag = 'internal scratch']
  #allocation2 [shape = 'f32[16,128]{1,0:T(8,128)}', space=vmem, size = 0x2000, scoped, tag = 'scratch operand']
  %s0 = inlined_call_operand.hbm [shape: f32[2,4,16,16], index: 0, kind: input, shape index: {}]
  %s1 = inlined_call_operand.hbm [shape: f32[2,3,16,16], index: 1, kind: output, shape index: {0}]
  %s2 = inlined_call_operand.hbm [shape: f32[2,3,16,16], index: 2, kind: output, shape index: {1}]
  %s3 = inlined_call_operand.hbm [shape: f32[2,3,16,16], index: 3, kind: output, shape index: {2}]
  %4 = xla_tuple %s1, %s2, %s3
  %s5 = sld [smem:[#allocation0]]
  $region57: #{tpu_custom_call.1} parent=0
    _
  %s7 = ssub.s32 1, %s5
  %s8 = scalar_select 0, %s7, %s5
  $region1: #{tpu_custom_call.1} parent=0
    #allocation3 [shape = 'u8[49152]{0}', space=vmem, size = 0xc000, scoped, tag = 'input window, operand 0']
    #allocation4 [shape = 's32[2]{0}', space=sflag, size = 0x8, scoped, tag = 'scoped memory for tpu_custom_call.1']
    #allocation5 [shape = 's32[2]{0}', space=sflag, size = 0x8, scoped, tag = 'scoped memory for tpu_custom_call.1']
    #allocation6 [shape = 'u8[49152]{0}', space=vmem, size = 0xc000, scoped, tag = 'output window, operand 0']
    #allocation7 [shape = 'u8[49152]{0}', space=vmem, size = 0xc000, scoped, tag = 'output window, operand 1']
    #allocation8 [shape = 's32[2]{0}', space=sflag, size = 0x8, scoped, tag = 'scoped memory for tpu_custom_call.1']
    #allocation9 [shape = 'u8[49152]{0}', space=vmem, size = 0xc000, scoped, tag = 'output window, operand 2']
    %9 = vsyncpa [#allocation4], 0
    %s10 = scalar_lea.sflag [#allocation4], 1
    %11 = vsyncpa %s10, 0
    %12 = vsyncpa [#allocation5], 0
    %s13 = scalar_lea.sflag [#allocation5], 1
    %14 = vsyncpa %s13, 0
    %15 = vsyncpa [#allocation8], 0
    %s16 = scalar_lea.sflag [#allocation8], 1
    %17 = vsyncpa %s16, 0
    loop: start=0, step=1, limit=4
    $region2: #{tpu_custom_call.1} parent=1 // loop_pre_header
      _
    $region3: #{tpu_custom_call.1} parent=1 // loop_header
      %s19 = sphi 0, %s23
      %p20 = scmp.ge.s32.totalorder %s19, 4
      %s29 = sphi 0, %s31
      %s32 = sphi 0, %s29
      %s33 = sphi 0, %s32
      %s49 = sphi 0, %s33
      %s55 = sphi 0, %s57
      %s58 = sphi 0, %s55
      %s59 = sphi 0, %s58
      %s75 = sphi 0, %s59
      %s81 = sphi 0, %s83
      %s84 = sphi 0, %s81
      %s85 = sphi 0, %s84
      %s101 = sphi 0, %s85
      %s107 = sphi 0, %s109
      %s110 = sphi 0, %s107
      %s111 = sphi 0, %s110
      %s127 = sphi 0, %s111
    $region4: #{tpu_custom_call.1} parent=1 // loop_header_branch
      %22 = sbr.rel (%p20) target = $region8
    $region5: #{tpu_custom_call.1} parent=1 // loop_body
      %s24 = ssub.s32 %s19, 1
      %s25 = ssub.s32 %s19, 2
      %s26 = sadd.s32 %s19, 1
      %s27 = ssub.s32 %s19, %s26
      %p28 = scmp.eq.s32.totalorder %s27, 0
      %s30 = sadd.s32 %s29, 1
      %s31 = scalar_select %p28, %s29, %s30
      %p34 = pneg %p28
      %p35 = scmp.eq.s32.totalorder %s19, 1
      %p36 = por %p34, %p35
      %p37 = scmp.ne.s32.totalorder %s29, %s32
      %p38 = scmp.eq.s32.totalorder %s19, 0
      %p39 = por %p37, %p38
      %p40 = scmp.ne.s32.totalorder %s29, %s32
      %p41 = scmp.eq.s32.totalorder %s24, 1
      %p42 = por %p40, %p41
      %p43 = scmp.ne.s32.totalorder %s32, %s33
      %p44 = scmp.eq.s32.totalorder %s24, 0
      %p45 = por %p43, %p44
      %p46 = scmp.ne.s32.totalorder %s32, %s33
      %p47 = scmp.eq.s32.totalorder %s25, 1
      %p48 = por %p46, %p47
      %p50 = scmp.ne.s32.totalorder %s33, %s49
      %p51 = scmp.eq.s32.totalorder %s25, 0
      %p52 = por %p50, %p51
      %s53 = ssub.s32 %s19, %s26
      %p54 = scmp.eq.s32.totalorder %s53, 0
      %s56 = sadd.s32 %s55, 1
      %s57 = scalar_select %p54, %s55, %s56
      %p60 = pneg %p54
      %p61 = scmp.eq.s32.totalorder %s19, 1
      %p62 = por %p60, %p61
      %p63 = scmp.ne.s32.totalorder %s55, %s58
      %p64 = scmp.eq.s32.totalorder %s19, 0
      %p65 = por %p63, %p64
      %p66 = scmp.ne.s32.totalorder %s55, %s58
      %p67 = scmp.eq.s32.totalorder %s24, 1
      %p68 = por %p66, %p67
      %p69 = scmp.ne.s32.totalorder %s58, %s59
      %p70 = scmp.eq.s32.totalorder %s24, 0
      %p71 = por %p69, %p70
      %p72 = scmp.ne.s32.totalorder %s58, %s59
      %p73 = scmp.eq.s32.totalorder %s25, 1
      %p74 = por %p72, %p73
      %p76 = scmp.ne.s32.totalorder %s59, %s75
      %p77 = scmp.eq.s32.totalorder %s25, 0
      %p78 = por %p76, %p77
      %s79 = ssub.s32 %s19, %s26
      %p80 = scmp.eq.s32.totalorder %s79, 0
      %s82 = sadd.s32 %s81, 1
      %s83 = scalar_select %p80, %s81, %s82
      %p86 = pneg %p80
      %p87 = scmp.eq.s32.totalorder %s19, 1
      %p88 = por %p86, %p87
      %p89 = scmp.ne.s32.totalorder %s81, %s84
      %p90 = scmp.eq.s32.totalorder %s19, 0
      %p91 = por %p89, %p90
      %p92 = scmp.ne.s32.totalorder %s81, %s84
      %p93 = scmp.eq.s32.totalorder %s24, 1
      %p94 = por %p92, %p93
      %p95 = scmp.ne.s32.totalorder %s84, %s85
      %p96 = scmp.eq.s32.totalorder %s24, 0
      %p97 = por %p95, %p96
      %p98 = scmp.ne.s32.totalorder %s84, %s85
      %p99 = scmp.eq.s32.totalorder %s25, 1
      %p100 = por %p98, %p99
      %p102 = scmp.ne.s32.totalorder %s85, %s101
      %p103 = scmp.eq.s32.totalorder %s25, 0
      %p104 = por %p102, %p103
      %s105 = ssub.s32 %s19, %s26
      %p106 = scmp.eq.s32.totalorder %s105, 0
      %s108 = sadd.s32 %s107, 1
      %s109 = scalar_select %p106, %s107, %s108
      %p112 = pneg %p106
      %p113 = scmp.eq.s32.totalorder %s19, 1
      %p114 = por %p112, %p113
      %p115 = scmp.ne.s32.totalorder %s107, %s110
      %p116 = scmp.eq.s32.totalorder %s19, 0
      %p117 = por %p115, %p116
      %p118 = scmp.ne.s32.totalorder %s107, %s110
      %p119 = scmp.eq.s32.totalorder %s24, 1
      %p120 = por %p118, %p119
      %p121 = scmp.ne.s32.totalorder %s110, %s111
      %p122 = scmp.eq.s32.totalorder %s24, 0
      %p123 = por %p121, %p122
      %p124 = scmp.ne.s32.totalorder %s110, %s111
      %p125 = scmp.eq.s32.totalorder %s25, 1
      %p126 = por %p124, %p125
      %p128 = scmp.ne.s32.totalorder %s111, %s127
      %p129 = scmp.eq.s32.totalorder %s25, 0
      %p130 = por %p128, %p129
      %p131 = scmp.le.s32.totalorder 1, %s19
      %p132 = scmp.lt.s32.totalorder %s19, 3
      %p133 = pnand %p131, %p132
      %p134 = pneg %p133
      // Predicated region
      $region9: #{tpu_custom_call.1} parent=5 // pred_check
        _
      $region10: #{tpu_custom_call.1} parent=5 // pred_check_branch
        %136 = sbr.rel (%p133) target = $region12
      $region11: #{tpu_custom_call.1} parent=5 // pred_region
        %s137 = ssub.s32 %s19, 1
      $region12: #{tpu_custom_call.1} parent=5 // pred_fallthru
        _
      %p138 = scmp.lt.s32.totalorder %s19, 2
      // Predicated region
      $region13: #{tpu_custom_call.1} parent=5 // pred_check
        %p139 = pneg %p138
      $region14: #{tpu_custom_call.1} parent=5 // pred_check_branch
        %141 = sbr.rel (%p139) target = $region16
      $region15: #{tpu_custom_call.1} parent=5 // pred_region
        // Predicated region
        $region17: #{tpu_custom_call.1} parent=15 // pred_check
          %p142 = pneg %p39
        $region18: #{tpu_custom_call.1} parent=15 // pred_check_branch
          %144 = sbr.rel (%p142) target = $region20
        $region19: #{tpu_custom_call.1} parent=15 // pred_region
          %s145 = sand.u32 %s29, 1
          %s146 = scalar_lea.sflag [#allocation4], %s145
          %s147 = sand.u32 %s29, 1
          %s148 = smul.addr %s147, 48
          %s149 = scalar_lea.vmem [#allocation3], %s148
          %s151 = ssub.s32 768, 768
          %152 = vsyncadd %s146, %s151
          %s153 = smul.addr %s19, 8
          %s154 = smul.addr %s153, 128
          %s155 = scalar_lea.hbm %s0, %s154
          %s156 = sshll.u32 %s149, 4
          %s157 = int_to_ptr.vmem [resolvable:$true] %s156
          %162 = dma.hbm_to_vmem [thread:$0]  %s155, 768, %s157, %s146, 128, 128, 8
        $region20: #{tpu_custom_call.1} parent=15 // pred_fallthru
          _
      $region16: #{tpu_custom_call.1} parent=5 // pred_fallthru
        _
      %p163 = scmp.le.s32.totalorder 1, %s19
      %p164 = scmp.lt.s32.totalorder %s19, 3
      %p165 = pnand %p163, %p164
      %p166 = pneg %p165
      // Predicated region
      $region21: #{tpu_custom_call.1} parent=5 // pred_check
        _
      $region22: #{tpu_custom_call.1} parent=5 // pred_check_branch
        %168 = sbr.rel (%p165) target = $region24
      $region23: #{tpu_custom_call.1} parent=5 // pred_region
        %s169 = ssub.s32 %s19, 1
        %s170 = sand.u32 %s32, 1
        %s171 = scalar_lea.sflag [#allocation4], %s170
        %s172 = sand.u32 %s32, 1
        %s173 = smul.addr %s172, 48
        %s174 = scalar_lea.vmem [#allocation3], %s173
        // Predicated region
        $region25: #{tpu_custom_call.1} parent=23 // pred_check
          %p175 = pneg %p45
        $region26: #{tpu_custom_call.1} parent=23 // pred_check_branch
          %177 = sbr.rel (%p175) target = $region28
        $region27: #{tpu_custom_call.1} parent=23 // pred_region
          %178 = dma.done %s171, 768
        $region28: #{tpu_custom_call.1} parent=23 // pred_fallthru
          _
        %s179 = sand.u32 %s32, 1
        %s180 = scalar_lea.sflag [#allocation4], %s179
        %s181 = sand.u32 %s32, 1
        %s182 = smul.addr %s181, 48
        %s183 = scalar_lea.vmem [#allocation3], %s182
        %p184 = pneg %p45
        %p185 = pneg %p42
        %p186 = pneg %p71
        %p187 = pneg %p68
        %s188 = sand.u32 %s58, 1
        %s189 = scalar_lea.sflag [#allocation5], %s188
        %s190 = sand.u32 %s58, 1
        %s191 = smul.addr %s190, 48
        %s192 = scalar_lea.vmem [#allocation6], %s191
        %p193 = pneg %p97
        %p194 = pneg %p94
        %s195 = sand.u32 %s24, 1
        %s196 = scalar_lea.sflag [#allocation8], %s195
        %s197 = sand.u32 %s84, 1
        %s198 = smul.addr %s197, 48
        %s199 = scalar_lea.vmem [#allocation7], %s198
        %p200 = pneg %p123
        %p201 = pneg %p120
        %s202 = sand.u32 %s24, 1
        %s203 = scalar_lea.sflag [#allocation8], %s202
        %s204 = sand.u32 %s110, 1
        %s205 = smul.addr %s204, 48
        %s206 = scalar_lea.vmem [#allocation9], %s205
        %v207 = vlaneseq
        %v208 = vand.u32 %v207, 127
        %v209 = vlaneseq
        %v210 = vshrl.u32 %v209, 7
        %v211 = vadd.s32 %v210, 8
        %vm212 = vcmp.eq.s32.totalorder %v208, 0
        %vm213 = vcmp.eq.s32.totalorder %v208, 15
        %vm214 = vcmp.eq.s32.totalorder %v210, 0
        %vm215 = vcmp.eq.s32.totalorder %v211, 0
        %vm216 = vcmp.eq.s32.totalorder %v210, 15
        %vm217 = vcmp.eq.s32.totalorder %v211, 15
        %v218 = vld [vmem:[%s174] sm:$0xff]
        %v219 = vld [vmem:[%s174 + $0x8] sm:$0xff]
        %v220 = vld [vmem:[%s174 + $0x10] sm:$0xff]
        %v221 = vld [vmem:[%s174 + $0x18] sm:$0xff]
        %v222 = vld [vmem:[%s174 + $0x20] sm:$0xff]
        %v223 = vld [vmem:[%s174 + $0x28] sm:$0xff]
        %vm224 = vcmask 130048
        %225 = vst.msk [vmem:[#allocation2] sm:$0xff] %vm224, %v218
        %226 = vst.msk [vmem:[#allocation2 + $0x8] sm:$0xff] %vm224, %v219
        %v227 = vld [vmem:[#allocation2] sm:$0xff]
        %v228 = vld [vmem:[#allocation2 + $0x8] sm:$0xff]
        %229 = vrot.lane.b32.xlu0 %v227, 1
        %v230 = vpop.permute.xlu0 %229
        %231 = vrot.lane.b32.xlu0 %v228, 1
        %v232 = vpop.permute.xlu0 %231
        %v233 = vsel %vm212, 0.0, %v230
        %v234 = vsel %vm212, 0.0, %v232
        %235 = vrot.lane.b32.xlu0 %v227, 127
        %v236 = vpop.permute.xlu0 %235
        %237 = vrot.lane.b32.xlu0 %v228, 127
        %v238 = vpop.permute.xlu0 %237
        %v239 = vsel %vm213, 0.0, %v236
        %v240 = vsel %vm213, 0.0, %v238
        %v241 = vmul.f32 %v227, 2.0
        %v242 = vmul.f32 %v228, 2.0
        %v243 = vadd.f32 %v233, %v241
        %v244 = vadd.f32 %v234, %v242
        %v245 = vadd.f32 %v243, %v239
        %v246 = vadd.f32 %v244, %v240
        %v247 = vsub.f32 %v233, %v239
        %v248 = vsub.f32 %v234, %v240
        %v249 = vrot.slane %v245, 7
        %v250 = vrot.slane %v246, 7
        %vm251 = vcmp.lt.s32.totalorder %v210, 1
        %v252 = vsel %vm251, %v249, %v250
        %v253 = vsel %vm251, %v250, %v249
        %v254 = vsel %vm214, 0.0, %v253
        %v255 = vsel %vm215, 0.0, %v252
        %v256 = vrot.slane %v245, 1
        %v257 = vrot.slane %v246, 1
        %vm258 = vcmp.lt.s32.totalorder %v210, 7
        %v259 = vsel %vm258, %v256, %v257
        %v260 = vsel %vm258, %v257, %v256
        %v261 = vsel %vm216, 0.0, %v259
        %v262 = vsel %vm217, 0.0, %v260
        %v263 = vrot.slane %v247, 7
        %v264 = vrot.slane %v248, 7
        %v265 = vsel %vm251, %v263, %v264
        %v266 = vsel %vm251, %v264, %v263
        %v267 = vsel %vm214, 0.0, %v266
        %v268 = vsel %vm215, 0.0, %v265
        %v269 = vrot.slane %v247, 1
        %v270 = vrot.slane %v248, 1
        %v271 = vsel %vm258, %v269, %v270
        %v272 = vsel %vm258, %v270, %v269
        %v273 = vsel %vm216, 0.0, %v271
        %v274 = vsel %vm217, 0.0, %v272
        %v275 = vsub.f32 %v254, %v261
        %v276 = vsub.f32 %v255, %v262
        %v277 = vmul.f32 %v247, 2.0
        %v278 = vmul.f32 %v248, 2.0
        %v279 = vadd.f32 %v267, %v277
        %v280 = vadd.f32 %v268, %v278
        %v281 = vadd.f32 %v279, %v273
        %v282 = vadd.f32 %v280, %v274
        %v283 = vmul.f32 %v275, %v275
        %v284 = vmul.f32 %v276, %v276
        %v285 = vmul.f32 %v281, %v281
        %v286 = vmul.f32 %v282, %v282
        %v287 = vadd.f32 %v283, %v285
        %v288 = vadd.f32 %v284, %v286
        %v289 = vadd.f32 %v287, 1e-06
        %v290 = vadd.f32 %v288, 1e-06
        %v291 = vrsqrt.pop %v289
        %v292 = vmul.f32 %v289, %v291
        %vm293 = vcmp.eq.f32.partialorder %v289, inf
        %v294 = vsel %vm293, %v289, %v292
        %vm295 = vcmp.eq.f32.partialorder %v289, 0.0
        %v296 = vand.u32 %v289, 2147483648
        %v297 = vsel %vm295, %v296, %v294
        %v298 = vrsqrt.pop %v290
        %v299 = vmul.f32 %v290, %v298
        %vm300 = vcmp.eq.f32.partialorder %v290, inf
        %v301 = vsel %vm300, %v290, %v299
        %vm302 = vcmp.eq.f32.partialorder %v290, 0.0
        %v303 = vand.u32 %v290, 2147483648
        %v304 = vsel %vm302, %v303, %v301
        %305 = vst.msk [vmem:[%s192] sm:$0xff] %vm224, %v297
        %306 = vst.msk [vmem:[%s192 + $0x8] sm:$0xff] %vm224, %v304
        %307 = vst.msk [vmem:[%s199] sm:$0xff] %vm224, %v281
        %308 = vst.msk [vmem:[%s199 + $0x8] sm:$0xff] %vm224, %v282
        %309 = vst.msk [vmem:[%s206] sm:$0xff] %vm224, %v275
        %310 = vst.msk [vmem:[%s206 + $0x8] sm:$0xff] %vm224, %v276
        %311 = vst.msk [vmem:[#allocation2] sm:$0xff] %vm224, %v220
        %312 = vst.msk [vmem:[#allocation2 + $0x8] sm:$0xff] %vm224, %v221
        %v313 = vld [vmem:[#allocation2] sm:$0xff]
        %v314 = vld [vmem:[#allocation2 + $0x8] sm:$0xff]
        %315 = vrot.lane.b32.xlu0 %v313, 1
        %v316 = vpop.permute.xlu0 %315
        %317 = vrot.lane.b32.xlu0 %v314, 1
        %v318 = vpop.permute.xlu0 %317
        %v319 = vsel %vm212, 0.0, %v316
        %v320 = vsel %vm212, 0.0, %v318
        %321 = vrot.lane.b32.xlu0 %v313, 127
        %v322 = vpop.permute.xlu0 %321
        %323 = vrot.lane.b32.xlu0 %v314, 127
        %v324 = vpop.permute.xlu0 %323
        %v325 = vsel %vm213, 0.0, %v322
        %v326 = vsel %vm213, 0.0, %v324
        %v327 = vmul.f32 %v313, 2.0
        %v328 = vmul.f32 %v314, 2.0
        %v329 = vadd.f32 %v319, %v327
        %v330 = vadd.f32 %v320, %v328
        %v331 = vadd.f32 %v329, %v325
        %v332 = vadd.f32 %v330, %v326
        %v333 = vsub.f32 %v319, %v325
        %v334 = vsub.f32 %v320, %v326
        %v335 = vrot.slane %v331, 7
        %v336 = vrot.slane %v332, 7
        %v337 = vsel %vm251, %v335, %v336
        %v338 = vsel %vm251, %v336, %v335
        %v339 = vsel %vm214, 0.0, %v338
        %v340 = vsel %vm215, 0.0, %v337
        %v341 = vrot.slane %v331, 1
        %v342 = vrot.slane %v332, 1
        %v343 = vsel %vm258, %v341, %v342
        %v344 = vsel %vm258, %v342, %v341
        %v345 = vsel %vm216, 0.0, %v343
        %v346 = vsel %vm217, 0.0, %v344
        %v347 = vrot.slane %v333, 7
        %v348 = vrot.slane %v334, 7
        %v349 = vsel %vm251, %v347, %v348
        %v350 = vsel %vm251, %v348, %v347
        %v351 = vsel %vm214, 0.0, %v350
        %v352 = vsel %vm215, 0.0, %v349
        %v353 = vrot.slane %v333, 1
        %v354 = vrot.slane %v334, 1
        %v355 = vsel %vm258, %v353, %v354
        %v356 = vsel %vm258, %v354, %v353
        %v357 = vsel %vm216, 0.0, %v355
        %v358 = vsel %vm217, 0.0, %v356
        %v359 = vsub.f32 %v339, %v345
        %v360 = vsub.f32 %v340, %v346
        %v361 = vmul.f32 %v333, 2.0
        %v362 = vmul.f32 %v334, 2.0
        %v363 = vadd.f32 %v351, %v361
        %v364 = vadd.f32 %v352, %v362
        %v365 = vadd.f32 %v363, %v357
        %v366 = vadd.f32 %v364, %v358
        %v367 = vmul.f32 %v359, %v359
        %v368 = vmul.f32 %v360, %v360
        %v369 = vmul.f32 %v365, %v365
        %v370 = vmul.f32 %v366, %v366
        %v371 = vadd.f32 %v367, %v369
        %v372 = vadd.f32 %v368, %v370
        %v373 = vadd.f32 %v371, 1e-06
        %v374 = vadd.f32 %v372, 1e-06
        %v375 = vrsqrt.pop %v373
        %v376 = vmul.f32 %v373, %v375
        %vm377 = vcmp.eq.f32.partialorder %v373, inf
        %v378 = vsel %vm377, %v373, %v376
        %vm379 = vcmp.eq.f32.partialorder %v373, 0.0
        %v380 = vand.u32 %v373, 2147483648
        %v381 = vsel %vm379, %v380, %v378
        %v382 = vrsqrt.pop %v374
        %v383 = vmul.f32 %v374, %v382
        %vm384 = vcmp.eq.f32.partialorder %v374, inf
        %v385 = vsel %vm384, %v374, %v383
        %vm386 = vcmp.eq.f32.partialorder %v374, 0.0
        %v387 = vand.u32 %v374, 2147483648
        %v388 = vsel %vm386, %v387, %v385
        %s389 = scalar_lea.vmem %s192, 16 [#allocation6]
        %390 = vst.msk [vmem:[%s389] sm:$0xff] %vm224, %v381
        %391 = vst.msk [vmem:[%s389 + $0x8] sm:$0xff] %vm224, %v388
        %s392 = scalar_lea.vmem %s199, 16 [#allocation7]
        %393 = vst.msk [vmem:[%s392] sm:$0xff] %vm224, %v365
        %394 = vst.msk [vmem:[%s392 + $0x8] sm:$0xff] %vm224, %v366
        %s395 = scalar_lea.vmem %s206, 16 [#allocation9]
        %396 = vst.msk [vmem:[%s395] sm:$0xff] %vm224, %v359
        %397 = vst.msk [vmem:[%s395 + $0x8] sm:$0xff] %vm224, %v360
        %398 = vst.msk [vmem:[#allocation2] sm:$0xff] %vm224, %v222
        %399 = vst.msk [vmem:[#allocation2 + $0x8] sm:$0xff] %vm224, %v223
        %v400 = vld [vmem:[#allocation2] sm:$0xff]
        %v401 = vld [vmem:[#allocation2 + $0x8] sm:$0xff]
        %402 = vrot.lane.b32.xlu0 %v400, 1
        %v403 = vpop.permute.xlu0 %402
        %404 = vrot.lane.b32.xlu0 %v401, 1
        %v405 = vpop.permute.xlu0 %404
        %v406 = vsel %vm212, 0.0, %v403
        %v407 = vsel %vm212, 0.0, %v405
        %408 = vrot.lane.b32.xlu0 %v400, 127
        %v409 = vpop.permute.xlu0 %408
        %410 = vrot.lane.b32.xlu0 %v401, 127
        %v411 = vpop.permute.xlu0 %410
        %v412 = vsel %vm213, 0.0, %v409
        %v413 = vsel %vm213, 0.0, %v411
        %v414 = vmul.f32 %v400, 2.0
        %v415 = vmul.f32 %v401, 2.0
        %v416 = vadd.f32 %v406, %v414
        %v417 = vadd.f32 %v407, %v415
        %v418 = vadd.f32 %v416, %v412
        %v419 = vadd.f32 %v417, %v413
        %v420 = vsub.f32 %v406, %v412
        %v421 = vsub.f32 %v407, %v413
        %v422 = vrot.slane %v418, 7
        %v423 = vrot.slane %v419, 7
        %v424 = vsel %vm251, %v422, %v423
        %v425 = vsel %vm251, %v423, %v422
        %v426 = vsel %vm214, 0.0, %v425
        %v427 = vsel %vm215, 0.0, %v424
        %v428 = vrot.slane %v418, 1
        %v429 = vrot.slane %v419, 1
        %v430 = vsel %vm258, %v428, %v429
        %v431 = vsel %vm258, %v429, %v428
        %v432 = vsel %vm216, 0.0, %v430
        %v433 = vsel %vm217, 0.0, %v431
        %v434 = vrot.slane %v420, 7
        %v435 = vrot.slane %v421, 7
        %v436 = vsel %vm251, %v434, %v435
        %v437 = vsel %vm251, %v435, %v434
        %v438 = vsel %vm214, 0.0, %v437
        %v439 = vsel %vm215, 0.0, %v436
        %v440 = vrot.slane %v420, 1
        %v441 = vrot.slane %v421, 1
        %v442 = vsel %vm258, %v440, %v441
        %v443 = vsel %vm258, %v441, %v440
        %v444 = vsel %vm216, 0.0, %v442
        %v445 = vsel %vm217, 0.0, %v443
        %v446 = vsub.f32 %v426, %v432
        %v447 = vsub.f32 %v427, %v433
        %v448 = vmul.f32 %v420, 2.0
        %v449 = vmul.f32 %v421, 2.0
        %v450 = vadd.f32 %v438, %v448
        %v451 = vadd.f32 %v439, %v449
        %v452 = vadd.f32 %v450, %v444
        %v453 = vadd.f32 %v451, %v445
        %v454 = vmul.f32 %v446, %v446
        %v455 = vmul.f32 %v447, %v447
        %v456 = vmul.f32 %v452, %v452
        %v457 = vmul.f32 %v453, %v453
        %v458 = vadd.f32 %v454, %v456
        %v459 = vadd.f32 %v455, %v457
        %v460 = vadd.f32 %v458, 1e-06
        %v461 = vadd.f32 %v459, 1e-06
        %v462 = vrsqrt.pop %v460
        %v463 = vmul.f32 %v460, %v462
        %vm464 = vcmp.eq.f32.partialorder %v460, inf
        %v465 = vsel %vm464, %v460, %v463
        %vm466 = vcmp.eq.f32.partialorder %v460, 0.0
        %v467 = vand.u32 %v460, 2147483648
        %v468 = vsel %vm466, %v467, %v465
        %v469 = vrsqrt.pop %v461
        %v470 = vmul.f32 %v461, %v469
        %vm471 = vcmp.eq.f32.partialorder %v461, inf
        %v472 = vsel %vm471, %v461, %v470
        %vm473 = vcmp.eq.f32.partialorder %v461, 0.0
        %v474 = vand.u32 %v461, 2147483648
        %v475 = vsel %vm473, %v474, %v472
        %s476 = scalar_lea.vmem %s192, 32 [#allocation6]
        %477 = vst.msk [vmem:[%s476] sm:$0xff] %vm224, %v468
        %478 = vst.msk [vmem:[%s476 + $0x8] sm:$0xff] %vm224, %v475
        %s479 = scalar_lea.vmem %s199, 32 [#allocation7]
        %480 = vst.msk [vmem:[%s479] sm:$0xff] %vm224, %v452
        %481 = vst.msk [vmem:[%s479 + $0x8] sm:$0xff] %vm224, %v453
        %s482 = scalar_lea.vmem %s206, 32 [#allocation9]
        %483 = vst.msk [vmem:[%s482] sm:$0xff] %vm224, %v446
        %484 = vst.msk [vmem:[%s482 + $0x8] sm:$0xff] %vm224, %v447
        %s485 = sand.u32 %s58, 1
        %s486 = scalar_lea.sflag [#allocation5], %s485
        %s487 = sand.u32 %s58, 1
        %s488 = smul.addr %s487, 48
        %s489 = scalar_lea.vmem [#allocation6], %s488
        %s490 = sand.u32 %s24, 1
        %s491 = scalar_lea.sflag [#allocation8], %s490
        %s492 = sand.u32 %s84, 1
        %s493 = smul.addr %s492, 48
        %s494 = scalar_lea.vmem [#allocation7], %s493
        %s495 = sand.u32 %s24, 1
        %s496 = scalar_lea.sflag [#allocation8], %s495
        %s497 = sand.u32 %s110, 1
        %s498 = smul.addr %s497, 48
        %s499 = scalar_lea.vmem [#allocation9], %s498
        // Predicated region
        $region29: #{tpu_custom_call.1} parent=23 // pred_check
          %p500 = pneg %p68
        $region30: #{tpu_custom_call.1} parent=23 // pred_check_branch
          %502 = sbr.rel (%p500) target = $region32
        $region31: #{tpu_custom_call.1} parent=23 // pred_region
          %s504 = ssub.s32 768, 768
          %505 = vsyncadd %s486, %s504
          %s506 = smul.addr %s24, 6
          %s507 = smul.addr %s506, 128
          %s508 = scalar_lea.hbm %s1, %s507
          %s509 = sshll.u32 %s489, 4
          %s510 = int_to_ptr.vmem [resolvable:$true] %s509
          %515 = dma.vmem_to_hbm [thread:$0]  %s510, 768, %s508, %s486, 128, 128, 8
        $region32: #{tpu_custom_call.1} parent=23 // pred_fallthru
          _
        // Predicated region
        $region33: #{tpu_custom_call.1} parent=23 // pred_check
          %p516 = pneg %p94
        $region34: #{tpu_custom_call.1} parent=23 // pred_check_branch
          %518 = sbr.rel (%p516) target = $region36
        $region35: #{tpu_custom_call.1} parent=23 // pred_region
          %s520 = ssub.s32 768, 768
          %521 = vsyncadd %s491, %s520
          %s522 = smul.addr %s24, 6
          %s523 = smul.addr %s522, 128
          %s524 = scalar_lea.hbm %s2, %s523
          %s525 = sshll.u32 %s494, 4
          %s526 = int_to_ptr.vmem [resolvable:$true] %s525
          %531 = dma.vmem_to_hbm [thread:$0]  %s526, 768, %s524, %s491, 128, 128, 8
        $region36: #{tpu_custom_call.1} parent=23 // pred_fallthru
          _
        // Predicated region
        $region37: #{tpu_custom_call.1} parent=23 // pred_check
          %p532 = pneg %p120
        $region38: #{tpu_custom_call.1} parent=23 // pred_check_branch
          %534 = sbr.rel (%p532) target = $region40
        $region39: #{tpu_custom_call.1} parent=23 // pred_region
          %s536 = ssub.s32 768, 768
          %537 = vsyncadd %s496, %s536
          %s538 = smul.addr %s24, 6
          %s539 = smul.addr %s538, 128
          %s540 = scalar_lea.hbm %s3, %s539
          %s541 = sshll.u32 %s499, 4
          %s542 = int_to_ptr.vmem [resolvable:$true] %s541
          %547 = dma.vmem_to_hbm [thread:$0]  %s542, 768, %s540, %s496, 128, 128, 8
        $region40: #{tpu_custom_call.1} parent=23 // pred_fallthru
          _
      $region24: #{tpu_custom_call.1} parent=5 // pred_fallthru
        _
      %p548 = scmp.le.s32.totalorder 2, %s19
      // Predicated region
      $region41: #{tpu_custom_call.1} parent=5 // pred_check
        %p549 = pneg %p548
      $region42: #{tpu_custom_call.1} parent=5 // pred_check_branch
        %551 = sbr.rel (%p549) target = $region44
      $region43: #{tpu_custom_call.1} parent=5 // pred_region
        %s552 = ssub.s32 %s19, 2
        // Predicated region
        $region45: #{tpu_custom_call.1} parent=43 // pred_check
          %p553 = pneg %p74
        $region46: #{tpu_custom_call.1} parent=43 // pred_check_branch
          %555 = sbr.rel (%p553) target = $region48
        $region47: #{tpu_custom_call.1} parent=43 // pred_region
          %s556 = sand.u32 %s59, 1
          %s557 = scalar_lea.sflag [#allocation5], %s556
          %s558 = sand.u32 %s59, 1
          %s559 = smul.addr %s558, 48
          %s560 = scalar_lea.vmem [#allocation6], %s559
          %561 = dma.done %s557, 768
        $region48: #{tpu_custom_call.1} parent=43 // pred_fallthru
          _
        // Predicated region
        $region49: #{tpu_custom_call.1} parent=43 // pred_check
          %p562 = pneg %p100
        $region50: #{tpu_custom_call.1} parent=43 // pred_check_branch
          %564 = sbr.rel (%p562) target = $region52
        $region51: #{tpu_custom_call.1} parent=43 // pred_region
          %s565 = sand.u32 %s25, 1
          %s566 = scalar_lea.sflag [#allocation8], %s565
          %s567 = sand.u32 %s85, 1
          %s568 = smul.addr %s567, 48
          %s569 = scalar_lea.vmem [#allocation7], %s568
          %570 = dma.done %s566, 768
        $region52: #{tpu_custom_call.1} parent=43 // pred_fallthru
          _
        // Predicated region
        $region53: #{tpu_custom_call.1} parent=43 // pred_check
          %p571 = pneg %p126
        $region54: #{tpu_custom_call.1} parent=43 // pred_check_branch
          %573 = sbr.rel (%p571) target = $region56
        $region55: #{tpu_custom_call.1} parent=43 // pred_region
          %s574 = sand.u32 %s25, 1
          %s575 = scalar_lea.sflag [#allocation8], %s574
          %s576 = sand.u32 %s111, 1
          %s577 = smul.addr %s576, 48
          %s578 = scalar_lea.vmem [#allocation9], %s577
          %579 = dma.done %s575, 768
        $region56: #{tpu_custom_call.1} parent=43 // pred_fallthru
          _
      $region44: #{tpu_custom_call.1} parent=5 // pred_fallthru
        _
    $region6: #{tpu_custom_call.1} parent=1 // loop_footer
      %s23 = sadd.s32 1, %s19
    $region7: #{tpu_custom_call.1} parent=1 // loop_footer_branch
      %18 = sbr.rel target = $region3
    $region8: #{tpu_custom_call.1} parent=1 // loop_exit
      _
    %580 = vsyncpa [#allocation4], 1
    %s581 = scalar_lea.sflag [#allocation4], 1
    %582 = vsyncpa %s581, 1
    %583 = vsyncpa [#allocation5], 1
    %s584 = scalar_lea.sflag [#allocation5], 1
    %585 = vsyncpa %s584, 1
    %586 = vsyncpa [#allocation8], 1
    %s587 = scalar_lea.sflag [#allocation8], 1
    %588 = vsyncpa %s587, 1

</llo_original>
